<compile_context>
chip_gen: v5e
topology: v5e:2x2
jax: 0.10.0
libtpu: 0.0.40
codegen_flags: <defaults>
</compile_context>

<pallas_src>
import functools

import jax
import jax.numpy as jnp
from jax.experimental import pallas as pl
from jax.experimental.pallas import tpu as pltpu


def _round_up(x: int, m: int) -> int:
    return ((x + m - 1) // m) * m


def linear_kernel(x_ref, w_ref, b_ref, o_ref):
    # Whole problem resident in VMEM: one MXU contraction (f32 accumulate),
    # one VPU bias add, one cast + lane-dense store.
    y = jnp.dot(x_ref[...], w_ref[...], preferred_element_type=jnp.float32)
    o_ref[...] = (y + b_ref[...]).astype(o_ref.dtype)


def pack_params(w, b):
    """One-time parameter packing (hoisted out of the per-forward path).

    w: [out_size, in_size] float32 (PyTorch Linear.weight layout)
    b: [out_size]          float32
    returns:
      w_packed: [in_size, N_p] float32  (transposed, lane dim padded to 128)
      b_packed: [1, N_p]       float32
    """
    out_size, in_size = w.shape
    n_p = _round_up(out_size, 128)  # lane-dense output columns
    w_packed = jnp.zeros((in_size, n_p), jnp.float32).at[:, :out_size].set(w.T)
    b_packed = jnp.zeros((1, n_p), jnp.float32).at[0, :out_size].set(b)
    return w_packed, b_packed


@functools.partial(jax.jit, static_argnames=("out_size",))
def mlp_forward(x, w_packed, b_packed, out_size):
    """Pallas forward matching torch.nn.Linear: y = x @ w.T + b.

    x:        [B, in_size]   float32 (un-padded; Mosaic handles sub-(8,128))
    w_packed: [in_size, N_p] float32 (pre-packed once via pack_params)
    b_packed: [1, N_p]       float32
    returns:  [B, out_size]  float32
    """
    B, _ = x.shape
    n_p = w_packed.shape[1]

    # Single invocation, whole arrays resident in VMEM — no grid, nothing to
    # tile at this size. The kernel is launch/DMA-latency bound, not slot
    # bound, so the body stays minimal.
    y_p = pl.pallas_call(
        linear_kernel,
        out_shape=jax.ShapeDtypeStruct((B, n_p), jnp.float32),
        in_specs=[
            pl.BlockSpec(memory_space=pltpu.MemorySpace.VMEM),
            pl.BlockSpec(memory_space=pltpu.MemorySpace.VMEM),
            pl.BlockSpec(memory_space=pltpu.MemorySpace.VMEM),
        ],
        out_specs=pl.BlockSpec(memory_space=pltpu.MemorySpace.VMEM),
    )(x, w_packed, b_packed)

    # Slice valid columns outside the kernel (keeps the in-kernel store
    # lane-dense / unmasked).
    return y_p[:, :out_size]


if __name__ == "__main__":
    in_size = 8
    out_size = 1
    batch = 8

    key = jax.random.PRNGKey(0)
    kx, kw, kb = jax.random.split(key, 3)

    # Deterministic params mimicking nn.Linear init: U(-1/sqrt(in), 1/sqrt(in)).
    bound = 1.0 / (in_size ** 0.5)
    w = jax.random.uniform(kw, (out_size, in_size), jnp.float32, -bound, bound)
    b = jax.random.uniform(kb, (out_size,), jnp.float32, -bound, bound)
    x = jax.random.normal(kx, (batch, in_size), jnp.float32)

    # Parameter packing happens once, outside the forward path.
    w_packed, b_packed = pack_params(w, b)
    w_packed, b_packed = jax.block_until_ready((w_packed, b_packed))

    y = mlp_forward(x, w_packed, b_packed, out_size)
    y = jax.block_until_ready(y)

    # Reference check (same math as torch.nn.Linear forward).
    y_ref = x @ w.T + b
    assert y.shape == (batch, out_size)
    assert jnp.allclose(y, y_ref, atol=1e-5, rtol=1e-5)

    print("KERNEL_OK")
</pallas_src>

<mosaic_0001>
module attributes {stable_mosaic.version = 11 : i64} {
  func.func @linear_kernel(%arg0: memref<8x8xf32, #tpu.memory_space<vmem>>, %arg1: memref<8x128xf32, #tpu.memory_space<vmem>>, %arg2: memref<1x128xf32, #tpu.memory_space<vmem>>, %arg3: memref<8x128xf32, #tpu.memory_space<vmem>>) attributes {dimension_semantics = [], scalar_prefetch = 0 : i64, scratch_operands = 0 : i64, tpu.core_type = #tpu.core_type<tc>} {
    %c0 = arith.constant 0 : index
    %c0_0 = arith.constant 0 : index
    %0 = vector.load %arg0[%c0, %c0_0] : memref<8x8xf32, #tpu.memory_space<vmem>>, vector<8x8xf32>
    %c0_1 = arith.constant 0 : index
    %c0_2 = arith.constant 0 : index
    %1 = vector.load %arg1[%c0_1, %c0_2] : memref<8x128xf32, #tpu.memory_space<vmem>>, vector<8x128xf32>
    %cst = arith.constant dense<0.000000e+00> : vector<8x128xf32>
    %2 = tpu.matmul %0, %1, %cst {dimension_numbers = #tpu.dot_dimension_numbers<[1], [0], [0], [1], [0, 0, 1, 1], [], []>} : vector<8x8xf32>, vector<8x128xf32>, vector<8x128xf32> -> vector<8x128xf32>
    %c0_3 = arith.constant 0 : index
    %c0_4 = arith.constant 0 : index
    %3 = vector.load %arg2[%c0_3, %c0_4] : memref<1x128xf32, #tpu.memory_space<vmem>>, vector<1x128xf32>
    %4 = vector.broadcast %3 : vector<1x128xf32> to vector<8x128xf32>
    %5 = arith.addf %2, %4 : vector<8x128xf32>
    %c0_5 = arith.constant 0 : index
    %c0_6 = arith.constant 0 : index
    %6 = vector.load %arg3[%c0_5, %c0_6] : memref<8x128xf32, #tpu.memory_space<vmem>>, vector<8x128xf32>
    tpu.vector_store %arg3[%c0_5, %c0_6], %5 {strides = array<i32>} : memref<8x128xf32, #tpu.memory_space<vmem>>, vector<8x128xf32>,
    return
  }
}

</mosaic_0001>

<llo_original>
// kernel: mlp_forward.1
$region0: #{mlp_forward.1}
  #allocation0 [shape = 'u32[]', space=smem, size = 0x4, offset = 0x4, fixed_abs, tag = 'smem constant byte address 0x4 - core index']
  #allocation1 [shape = 'u32[72,128]{1,0:T(1,128)}', space=vmem, size = 0x9000, scoped, tag = 'internal scratch']
  %s0 = inlined_call_operand.hbm [shape: f32[8,8], index: 0, kind: input, shape index: {}]
  %s1 = inlined_call_operand.hbm [shape: f32[8,128], index: 1, kind: input, shape index: {}]
  %s2 = inlined_call_operand.vmem [shape: f32[1,128], index: 2, kind: input, shape index: {}]
  %s3 = inlined_call_operand.vmem [shape: f32[8,128], index: 3, kind: output, shape index: {}]
  %s4 = sld [smem:[#allocation0]]
  $region30: #{mlp_forward.1} parent=0
    _
  %s6 = ssub.s32 1, %s4
  %s7 = scalar_select 0, %s6, %s4
  $region1: #{mlp_forward.1} parent=0
    #allocation2 [shape = 'u8[4096]{0}', space=vmem, size = 0x1000, scoped, tag = 'input window, operand 0, single buffered']
    #allocation3 [shape = 's32[1]{0}', space=sflag, size = 0x4, scoped, tag = 'scoped memory for mlp_forward.1']
    #allocation4 [shape = 'u8[4096]{0}', space=vmem, size = 0x1000, scoped, tag = 'input window, operand 1, single buffered']
    #allocation5 [shape = 's32[1]{0}', space=sflag, size = 0x4, scoped, tag = 'scoped memory for mlp_forward.1']
    %8 = vsyncpa [#allocation3], 0
    %9 = vsyncpa [#allocation5], 0
    // Predicated region
    $region2: #{mlp_forward.1} parent=1 // pred_check
      _
    $region3: #{mlp_forward.1} parent=1 // pred_check_branch
      %11 = sbr.rel (0) target = $region5
    $region4: #{mlp_forward.1} parent=1 // pred_region
      %13 = vsyncadd [#allocation3], 0
      %s15 = sshll.u32 %s0, 4
      %s16 = int_to_ptr.hbm [resolvable:$true] %s15
      %s17 = sshll.u32 [#allocation2], 4
      %s18 = int_to_ptr.vmem [resolvable:$true] %s17
      %20 = dma.hbm_to_vmem [thread:$0]  %s16, 128, %s18, [#allocation3]
    $region5: #{mlp_forward.1} parent=1 // pred_fallthru
      _
    // Predicated region
    $region6: #{mlp_forward.1} parent=1 // pred_check
      _
    $region7: #{mlp_forward.1} parent=1 // pred_check_branch
      %22 = sbr.rel (0) target = $region9
    $region8: #{mlp_forward.1} parent=1 // pred_region
      %24 = vsyncadd [#allocation5], 0
      %s26 = sshll.u32 %s1, 4
      %s27 = int_to_ptr.hbm [resolvable:$true] %s26
      %s28 = sshll.u32 [#allocation4], 4
      %s29 = int_to_ptr.vmem [resolvable:$true] %s28
      %31 = dma.hbm_to_vmem [thread:$0]  %s27, 128, %s29, [#allocation5]
    $region9: #{mlp_forward.1} parent=1 // pred_fallthru
      _
    // Predicated region
    $region10: #{mlp_forward.1} parent=1 // pred_check
      _
    $region11: #{mlp_forward.1} parent=1 // pred_check_branch
      %33 = sbr.rel (0) target = $region13
    $region12: #{mlp_forward.1} parent=1 // pred_region
      _
    $region13: #{mlp_forward.1} parent=1 // pred_fallthru
      _
    // Predicated region
    $region14: #{mlp_forward.1} parent=1 // pred_check
      _
    $region15: #{mlp_forward.1} parent=1 // pred_check_branch
      %35 = sbr.rel (0) target = $region17
    $region16: #{mlp_forward.1} parent=1 // pred_region
      %37 = dma.done [#allocation3], 128
    $region17: #{mlp_forward.1} parent=1 // pred_fallthru
      _
    // Predicated region
    $region18: #{mlp_forward.1} parent=1 // pred_check
      _
    $region19: #{mlp_forward.1} parent=1 // pred_check_branch
      %39 = sbr.rel (0) target = $region21
    $region20: #{mlp_forward.1} parent=1 // pred_region
      %41 = dma.done [#allocation5], 128
    $region21: #{mlp_forward.1} parent=1 // pred_fallthru
      _
    %v42 = vld [vmem:[#allocation2] sm:$0xff]
    %v43 = vld [vmem:[#allocation4] sm:$0xff]
    %v44 = vld [vmem:[%s2] sm:$0x1]
    %v46 = vperm.slane %v44, 0
    %vm48 = vcmask 64512
    %v50 = vsel %vm48, %v42, 0
    %52 = vmatpush.msra.mxu0 0.0
    %53 = vmatpush.msra.mxu0 0.0
    %54 = vmatpush.msra.mxu0 0.0
    %55 = vmatpush.msra.mxu0 0.0
    %56 = vmatpush.msra.mxu0 0.0
    %57 = vmatpush.msra.mxu0 0.0
    %58 = vmatpush.msra.mxu0 0.0
    %59 = vmatpush.msra.mxu0 0.0
    %60 = vmatpush.msra.mxu0 0.0
    %61 = vmatpush.msra.mxu0 0.0
    %62 = vmatpush.msra.mxu0 0.0
    %63 = vmatpush.msra.mxu0 0.0
    %64 = vmatpush.msra.mxu0 0.0
    %65 = vmatpush.msra.mxu0 0.0
    %66 = vmatpush.msra.mxu0 0.0
    %67 = vmatpush.msra.mxu0 %v43
    %68 = vmatmul.f32.gmra.mxu0 %v50
    %v69 = vpop.f32.mrf.mxu0
    %v70 = vadd.f32 %v46, %v69
    %71 = vdwg.mxu0
    %72 = vst [vmem:[%s3] sm:$0xff] %v70
    // Predicated region
    $region22: #{mlp_forward.1} parent=1 // pred_check
      _
    $region23: #{mlp_forward.1} parent=1 // pred_check_branch
      %74 = sbr.rel (0) target = $region25
    $region24: #{mlp_forward.1} parent=1 // pred_region
      _
    $region25: #{mlp_forward.1} parent=1 // pred_fallthru
      _
    // Predicated region
    $region26: #{mlp_forward.1} parent=1 // pred_check
      _
    $region27: #{mlp_forward.1} parent=1 // pred_check_branch
      %76 = sbr.rel (0) target = $region29
    $region28: #{mlp_forward.1} parent=1 // pred_region
      _
    $region29: #{mlp_forward.1} parent=1 // pred_fallthru
      _
    %77 = vsyncpa [#allocation3], 1
    %78 = vsyncpa [#allocation5], 1

</llo_original>
